<compile_context>
chip_gen: v5e
topology: v5e:2x2
jax: 0.10.0
libtpu: 0.0.40
codegen_flags: <defaults>
</compile_context>

<pallas_src>
import functools
import math

import jax
import jax.numpy as jnp
from jax.experimental import pallas as pl
from jax.experimental.pallas import tpu as pltpu


# --------------------------------------------------------------------------
# Hardware detection (best effort; conservative fallbacks).
# --------------------------------------------------------------------------
def _tpu_topology():
    """Returns (tensorcores_per_chip, per_core_vmem_capacity_bytes)."""
    is_v7 = False
    try:
        kind = jax.devices()[0].device_kind.lower()
        is_v7 = ("v7" in kind) or ("7x" in kind)
    except Exception:
        pass

    vmem = 64 << 20  # conservative fallback
    try:
        v = getattr(pltpu.get_tpu_info(), "vmem_capacity_bytes", None)
        if v:
            vmem = int(v)
    except Exception:
        pass
    if is_v7:
        # v7x VMEM is per TensorCore (64 MiB); never budget above that.
        vmem = min(vmem, 64 << 20)

    return (2 if is_v7 else 1), vmem


def _lane_dense_shape(rows, freq):
    """2-D view (R, C) with C lane-dense when a metadata-only reshape allows."""
    if freq % 128 == 0:
        return rows, freq
    total = rows * freq
    for width in (1024, 512, 256, 128):
        if total % width == 0:
            return total // width, width
    return rows, freq  # fallback: padded lanes, still correct


def _choose_tile_rows(rows, padded_lanes, in_itemsizes, target_block_bytes,
                      sublane_mult, vmem_budget_bytes):
    """Largest sublane-aligned tile height fitting target size & VMEM budget."""
    native_row = padded_lanes * max(in_itemsizes)
    # Per block-row: 2 pipeline buffers per input (native dtype) plus ~6
    # f32-sized in-kernel temporaries (upcasts, diff, squares, partials).
    per_row_footprint = 2 * padded_lanes * sum(in_itemsizes) + 6 * padded_lanes * 4
    t_target = max(1, target_block_bytes // native_row)
    t_budget = max(1, vmem_budget_bytes // per_row_footprint)
    t = (min(t_target, t_budget) // sublane_mult) * sublane_mult
    t = max(sublane_mult, t)
    return rows if t >= rows else t


# --------------------------------------------------------------------------
# Kernel: per-split, lane-resident partial sums.
# --------------------------------------------------------------------------
def _sc_partial_kernel(x_ref, y_ref, o_ref, *, tile_rows, rows,
                       blocks_per_split, acc_rows, needs_mask):
    """o_ref block is (2, acc_rows, C) float32:
         o_ref[0] accumulates per-lane sums of (y - x)^2
         o_ref[1] accumulates per-lane sums of  y^2
    """
    c = pl.program_id(0)   # split (TensorCore) index
    i = pl.program_id(1)   # row-block index within the split

    @pl.when(i == 0)
    def _():
        o_ref[...] = jnp.zeros_like(o_ref)

    x = x_ref[...].astype(jnp.float32)
    y = y_ref[...].astype(jnp.float32)
    lanes = x.shape[-1]

    def accumulate(d, yv):
        dd = d * d
        yy = yv * yv
        if acc_rows == 8:
            # Split the sublane axis into groups of 8 and add groups together:
            # pure VPU vreg adds, no intra-vreg (XLU) reduce per grid step.
            p0 = jnp.sum(dd.reshape(-1, 8, lanes), axis=0)
            p1 = jnp.sum(yy.reshape(-1, 8, lanes), axis=0)
        else:
            p0 = jnp.sum(dd, axis=0, keepdims=True)
            p1 = jnp.sum(yy, axis=0, keepdims=True)
        o_ref[0, :, :] += p0
        o_ref[1, :, :] += p1

    if needs_mask:
        rb = c * blocks_per_split + i          # logical (unclamped) block id
        is_edge = (rb + 1) * tile_rows > rows  # block extends past valid rows

        @pl.when(is_edge)
        def _():
            # Mask BEFORE squaring so padded / duplicated rows contribute 0.
            row_start = rb * tile_rows
            row_ids = row_start + jax.lax.broadcasted_iota(jnp.int32, x.shape, 0)
            valid = row_ids < rows
            accumulate(jnp.where(valid, y - x, 0.0), jnp.where(valid, y, 0.0))

        @pl.when(jnp.logical_not(is_edge))
        def _():
            accumulate(y - x, y)
    else:
        accumulate(y - x, y)


# --------------------------------------------------------------------------
# Wrapper.
# --------------------------------------------------------------------------
def spectral_convergence_loss(x_mag, y_mag, *, target_block_bytes=None,
                              num_splits=None):
    """Pallas implementation of SpectralConvergenceLoss.forward.

    Args:
      x_mag: (B, #frames, #freq_bins) predicted magnitude spectrogram.
      y_mag: (B, #frames, #freq_bins) ground-truth magnitude spectrogram.
    Returns:
      scalar float32 loss = ||y - x||_F / ||y||_F.
    """
    assert x_mag.shape == y_mag.shape, (x_mag.shape, y_mag.shape)
    *lead, F = x_mag.shape
    rows = int(math.prod(lead)) if lead else 1

    num_cores, vmem_cap = _tpu_topology()
    if num_splits is None:
        num_splits = num_cores                       # 1 on v5e/v6e, 2 on v7x
    if target_block_bytes is None:
        target_block_bytes = (4 << 20) if vmem_cap <= (64 << 20) else (8 << 20)

    # Metadata-only reshape to a lane-dense 2-D slab; no pad, no dtype copy.
    R, C = _lane_dense_shape(rows, F)
    x2 = jnp.reshape(x_mag, (R, C))
    y2 = jnp.reshape(y_mag, (R, C))

    itemsizes = (jnp.dtype(x2.dtype).itemsize, jnp.dtype(y2.dtype).itemsize)
    sublane_mult = {4: 8, 2: 16, 1: 32}.get(min(itemsizes), 8)
    padded_C = ((C + 127) // 128) * 128              # real lane footprint

    tile_rows = _choose_tile_rows(R, padded_C, itemsizes, target_block_bytes,
                                  sublane_mult, int(0.7 * vmem_cap))
    total_blocks = pl.cdiv(R, tile_rows)
    num_splits = min(num_splits, total_blocks)       # don't split tiny inputs
    blocks_per_split = pl.cdiv(total_blocks, num_splits)
    needs_mask = (R % tile_rows != 0) or (
        num_splits * blocks_per_split != total_blocks)
    acc_rows = 8 if tile_rows % 8 == 0 else 1

    def in_index_map(c, i):
        # Clamp so boundary/duplicate blocks never start out of range; the
        # in-kernel mask zeroes rows that don't logically belong to (c, i).
        rb = c * blocks_per_split + i
        return (jnp.minimum(rb, total_blocks - 1), 0)

    kernel = functools.partial(
        _sc_partial_kernel,
        tile_rows=tile_rows,
        rows=R,
        blocks_per_split=blocks_per_split,
        acc_rows=acc_rows,
        needs_mask=needs_mask,
    )

    # Split axis semantics: CORE_PARALLEL only when the chip really has that
    # many TensorCores (v7x); otherwise PARALLEL (safe) or ARBITRARY.
    if num_splits > 1 and num_cores >= num_splits:
        sem0 = pltpu.CORE_PARALLEL
    elif num_splits > 1:
        sem0 = pltpu.PARALLEL
    else:
        sem0 = pltpu.ARBITRARY
    dims = (sem0, pltpu.ARBITRARY)

    # Explicit scoped-VMEM budget: double-buffered inputs + in-kernel f32
    # temporaries + double-buffered output block, with headroom.
    out_block_bytes = 2 * acc_rows * padded_C * 4
    est = tile_rows * padded_C * (2 * sum(itemsizes) + 6 * 4) + 2 * out_block_bytes
    vmem_limit = int(min(max(est + (4 << 20), 32 << 20), int(0.9 * vmem_cap)))

    partials = pl.pallas_call(
        kernel,
        out_shape=jax.ShapeDtypeStruct((num_splits, 2, acc_rows, C), jnp.float32),
        grid_spec=pltpu.PrefetchScalarGridSpec(
            num_scalar_prefetch=0,
            grid=(num_splits, blocks_per_split),
            in_specs=[
                pl.BlockSpec((tile_rows, C), in_index_map),
                pl.BlockSpec((tile_rows, C), in_index_map),
            ],
            out_specs=pl.BlockSpec((None, 2, acc_rows, C),
                                   lambda c, i: (c, 0, 0, 0)),
        ),
        compiler_params=pltpu.CompilerParams(
            dimension_semantics=dims,
            vmem_limit_bytes=vmem_limit),
    )(x2, y2)

    # Tiny final reduction + sqrt/divide in plain JAX (a handful of lanes).
    sums = jnp.sum(partials, axis=(0, 2, 3))   # [||y-x||_F^2, ||y||_F^2]
    return jnp.sqrt(sums[0]) / jnp.sqrt(sums[1])


if __name__ == "__main__":
    key = jax.random.PRNGKey(0)
    kx, ky, kx2, ky2, kx3, ky3 = jax.random.split(key, 6)

    # 1) Base case: lane-aligned freq bins (F % 128 == 0), f32, single block.
    B, T, F = 2, 16, 128
    x_mag = jnp.abs(jax.random.normal(kx, (B, T, F), dtype=jnp.float32))
    y_mag = jnp.abs(jax.random.normal(ky, (B, T, F), dtype=jnp.float32))
    loss = jax.block_until_ready(spectral_convergence_loss(x_mag, y_mag))
    ref = jnp.linalg.norm(y_mag - x_mag) / jnp.linalg.norm(y_mag)
    assert jnp.allclose(loss, ref, rtol=1e-5, atol=1e-6), (loss, ref)

    # 2) Ragged rows + forced 2-way split (duplicate clamped block) + gated
    #    mask path; F with no lane-dense factorization (padded-lane fallback).
    B2, T2, F2 = 2, 33, 80
    x2 = jnp.abs(jax.random.normal(kx2, (B2, T2, F2), dtype=jnp.float32))
    y2 = jnp.abs(jax.random.normal(ky2, (B2, T2, F2), dtype=jnp.float32))
    loss2 = jax.block_until_ready(
        spectral_convergence_loss(x2, y2, target_block_bytes=4096, num_splits=2))
    ref2 = jnp.linalg.norm(y2 - x2) / jnp.linalg.norm(y2)
    assert jnp.allclose(loss2, ref2, rtol=1e-5, atol=1e-6), (loss2, ref2)

    # 3) Lane-dense re-blocking path (F % 128 != 0 but B*T*F divides 1024),
    #    bf16 inputs exercising in-vreg upcast and packed-dtype tile rounding.
    B3, T3, F3 = 2, 16, 96
    x3 = jnp.abs(jax.random.normal(kx3, (B3, T3, F3), dtype=jnp.float32)).astype(jnp.bfloat16)
    y3 = jnp.abs(jax.random.normal(ky3, (B3, T3, F3), dtype=jnp.float32)).astype(jnp.bfloat16)
    loss3 = jax.block_until_ready(spectral_convergence_loss(x3, y3))
    xf, yf = x3.astype(jnp.float32), y3.astype(jnp.float32)
    ref3 = jnp.linalg.norm(yf - xf) / jnp.linalg.norm(yf)
    assert jnp.allclose(loss3, ref3, rtol=1e-4, atol=1e-6), (loss3, ref3)

    print("KERNEL_OK")
</pallas_src>

<mosaic_0001>
module attributes {stable_mosaic.version = 11 : i64} {
  func.func @_sc_partial_kernel(%arg0: i32, %arg1: i32, %arg2: memref<32x128xf32, #tpu.memory_space<vmem>>, %arg3: memref<32x128xf32, #tpu.memory_space<vmem>>, %arg4: memref<1x2x8x128xf32, #tpu.memory_space<vmem>>) attributes {dimension_semantics = [#tpu.dimension_semantics<arbitrary>, #tpu.dimension_semantics<arbitrary>], iteration_bounds = array<i64: 1, 1>, scalar_prefetch = 0 : i64, scratch_operands = 0 : i64, tpu.core_type = #tpu.core_type<tc>, window_params = [{transform_indices = @transform_0, window_bounds = array<i64: 32, 128>}, {transform_indices = @transform_1, window_bounds = array<i64: 32, 128>}, {transform_indices = @transform_2, window_bounds = array<i64: 1, 2, 8, 128>}]} {
    %c0_i32 = arith.constant 0 : i32
    %0 = arith.cmpi eq, %arg1, %c0_i32 : i32
    %1 = arith.extui %0 : i1 to i32
    %c0_i32_0 = arith.constant 0 : i32
    %2 = arith.cmpi ne, %1, %c0_i32_0 : i32
    scf.if %2 {
      %cst_20 = arith.constant 0.000000e+00 : f32
      %24 = vector.broadcast %cst_20 : f32 to vector<2x8x128xf32>
      %c0_21 = arith.constant 0 : index
      %c0_22 = arith.constant 0 : index
      %c0_23 = arith.constant 0 : index
      %c0_24 = arith.constant 0 : index
      %25 = vector.load %arg4[%c0_21, %c0_22, %c0_23, %c0_24] : memref<1x2x8x128xf32, #tpu.memory_space<vmem>>, vector<1x2x8x128xf32>
      %26 = vector.shape_cast %25 : vector<1x2x8x128xf32> to vector<2x8x128xf32>
      %27 = vector.shape_cast %24 : vector<2x8x128xf32> to vector<1x2x8x128xf32>
      tpu.vector_store %arg4[%c0_21, %c0_22, %c0_23, %c0_24], %27 {strides = array<i32>} : memref<1x2x8x128xf32, #tpu.memory_space<vmem>>, vector<1x2x8x128xf32>,
    } else {
    }
    %c0 = arith.constant 0 : index
    %c0_1 = arith.constant 0 : index
    %3 = vector.load %arg2[%c0, %c0_1] : memref<32x128xf32, #tpu.memory_space<vmem>>, vector<32x128xf32>
    %c0_2 = arith.constant 0 : index
    %c0_3 = arith.constant 0 : index
    %4 = vector.load %arg3[%c0_2, %c0_3] : memref<32x128xf32, #tpu.memory_space<vmem>>, vector<32x128xf32>
    %5 = arith.subf %4, %3 : vector<32x128xf32>
    %6 = arith.mulf %5, %5 : vector<32x128xf32>
    %7 = arith.mulf %4, %4 : vector<32x128xf32>
    %8 = vector.shape_cast %6 : vector<32x128xf32> to vector<4x8x128xf32>
    %cst = arith.constant dense<0.000000e+00> : vector<8x128xf32>
    %9 = vector.multi_reduction <add>, %8, %cst [0] : vector<4x8x128xf32> to vector<8x128xf32>
    %10 = vector.shape_cast %7 : vector<32x128xf32> to vector<4x8x128xf32>
    %cst_4 = arith.constant dense<0.000000e+00> : vector<8x128xf32>
    %11 = vector.multi_reduction <add>, %10, %cst_4 [0] : vector<4x8x128xf32> to vector<8x128xf32>
    %c0_5 = arith.constant 0 : index
    %c0_6 = arith.constant 0 : index
    %c0_7 = arith.constant 0 : index
    %c0_8 = arith.constant 0 : index
    %12 = vector.load %arg4[%c0_5, %c0_6, %c0_7, %c0_8] : memref<1x2x8x128xf32, #tpu.memory_space<vmem>>, vector<1x1x8x128xf32>
    %13 = vector.shape_cast %12 : vector<1x1x8x128xf32> to vector<8x128xf32>
    %14 = arith.addf %13, %9 : vector<8x128xf32>
    %c0_9 = arith.constant 0 : index
    %c0_10 = arith.constant 0 : index
    %c0_11 = arith.constant 0 : index
    %c0_12 = arith.constant 0 : index
    %15 = vector.load %arg4[%c0_9, %c0_10, %c0_11, %c0_12] : memref<1x2x8x128xf32, #tpu.memory_space<vmem>>, vector<1x1x8x128xf32>
    %16 = vector.shape_cast %15 : vector<1x1x8x128xf32> to vector<8x128xf32>
    %17 = vector.shape_cast %14 : vector<8x128xf32> to vector<1x1x8x128xf32>
    tpu.vector_store %arg4[%c0_9, %c0_10, %c0_11, %c0_12], %17 {strides = array<i32>} : memref<1x2x8x128xf32, #tpu.memory_space<vmem>>, vector<1x1x8x128xf32>,
    %c0_13 = arith.constant 0 : index
    %c1 = arith.constant 1 : index
    %c0_14 = arith.constant 0 : index
    %c0_15 = arith.constant 0 : index
    %18 = vector.load %arg4[%c0_13, %c1, %c0_14, %c0_15] : memref<1x2x8x128xf32, #tpu.memory_space<vmem>>, vector<1x1x8x128xf32>
    %19 = vector.shape_cast %18 : vector<1x1x8x128xf32> to vector<8x128xf32>
    %20 = arith.addf %19, %11 : vector<8x128xf32>
    %c0_16 = arith.constant 0 : index
    %c1_17 = arith.constant 1 : index
    %c0_18 = arith.constant 0 : index
    %c0_19 = arith.constant 0 : index
    %21 = vector.load %arg4[%c0_16, %c1_17, %c0_18, %c0_19] : memref<1x2x8x128xf32, #tpu.memory_space<vmem>>, vector<1x1x8x128xf32>
    %22 = vector.shape_cast %21 : vector<1x1x8x128xf32> to vector<8x128xf32>
    %23 = vector.shape_cast %20 : vector<8x128xf32> to vector<1x1x8x128xf32>
    tpu.vector_store %arg4[%c0_16, %c1_17, %c0_18, %c0_19], %23 {strides = array<i32>} : memref<1x2x8x128xf32, #tpu.memory_space<vmem>>, vector<1x1x8x128xf32>,
    return
  }
  func.func @transform_0(%arg0: i32, %arg1: i32) -> (i32, i32) {
    %c1_i32 = arith.constant 1 : i32
    %0 = arith.muli %arg0, %c1_i32 : i32
    %1 = arith.addi %0, %arg1 : i32
    %c0_i32 = arith.constant 0 : i32
    %2 = arith.minsi %1, %c0_i32 : i32
    %c0_i32_0 = arith.constant 0 : i32
    %c0_i32_1 = arith.constant 0 : i32
    return %2, %c0_i32_0 : i32, i32
  }
  func.func @transform_1(%arg0: i32, %arg1: i32) -> (i32, i32) {
    %c1_i32 = arith.constant 1 : i32
    %0 = arith.muli %arg0, %c1_i32 : i32
    %1 = arith.addi %0, %arg1 : i32
    %c0_i32 = arith.constant 0 : i32
    %2 = arith.minsi %1, %c0_i32 : i32
    %c0_i32_0 = arith.constant 0 : i32
    %c0_i32_1 = arith.constant 0 : i32
    return %2, %c0_i32_0 : i32, i32
  }
  func.func @transform_2(%arg0: i32, %arg1: i32) -> (i32, i32, i32, i32) {
    %c0_i32 = arith.constant 0 : i32
    %c0_i32_0 = arith.constant 0 : i32
    %c0_i32_1 = arith.constant 0 : i32
    %c0_i32_2 = arith.constant 0 : i32
    return %arg0, %c0_i32, %c0_i32_0, %c0_i32_1 : i32, i32, i32, i32
  }
}

</mosaic_0001>

<llo_original>
// kernel: tpu_custom_call.1
$region0: #{tpu_custom_call.1}
  #allocation0 [shape = 'u32[]', space=smem, size = 0x4, offset = 0x4, fixed_abs, tag = 'smem constant byte address 0x4 - core index']
  #allocation1 [shape = 'u32[72,128]{1,0:T(1,128)}', space=vmem, size = 0x9000, scoped, tag = 'internal scratch']
  %s0 = inlined_call_operand.hbm [shape: f32[32,128], index: 0, kind: input, shape index: {}]
  %s1 = inlined_call_operand.hbm [shape: f32[32,128], index: 1, kind: input, shape index: {}]
  %s2 = inlined_call_operand.hbm [shape: f32[1,2,8,128], index: 2, kind: output, shape index: {}]
  %s3 = sld [smem:[#allocation0]]
  $region30: #{tpu_custom_call.1} parent=0
    _
  %s5 = ssub.s32 1, %s3
  %s6 = scalar_select 0, %s5, %s3
  $region1: #{tpu_custom_call.1} parent=0
    #allocation2 [shape = 'u8[16384]{0}', space=vmem, size = 0x4000, scoped, tag = 'input window, operand 0, single buffered']
    #allocation3 [shape = 's32[1]{0}', space=sflag, size = 0x4, scoped, tag = 'scoped memory for tpu_custom_call.1']
    #allocation4 [shape = 's32[1]{0}', space=sflag, size = 0x4, scoped, tag = 'scoped memory for tpu_custom_call.1']
    #allocation5 [shape = 'u8[16384]{0}', space=vmem, size = 0x4000, scoped, tag = 'input window, operand 1, single buffered']
    #allocation6 [shape = 's32[1]{0}', space=sflag, size = 0x4, scoped, tag = 'scoped memory for tpu_custom_call.1']
    #allocation7 [shape = 'u8[8192]{0}', space=vmem, size = 0x2000, scoped, tag = 'output window, operand 0, single buffered']
    %7 = vsyncpa [#allocation3], 0
    %8 = vsyncpa [#allocation6], 0
    %9 = vsyncpa [#allocation4], 0
    // Predicated region
    $region2: #{tpu_custom_call.1} parent=1 // pred_check
      _
    $region3: #{tpu_custom_call.1} parent=1 // pred_check_branch
      %11 = sbr.rel (0) target = $region5
    $region4: #{tpu_custom_call.1} parent=1 // pred_region
      %s12 = sadd.s32 0, 0
      %p13 = scmp.lt.s32.totalorder %s12, 0
      %s14 = scalar_select %p13, %s12, 0
      %s15 = smul.u32 4, %s14
      %17 = vsyncadd [#allocation3], 0
      %s18 = smul.addr %s15, 8
      %s19 = scalar_lea.hbm %s0, %s18
      %s20 = sshll.u32 %s19, 4
      %s21 = int_to_ptr.hbm [resolvable:$true] %s20
      %s22 = sshll.u32 [#allocation2], 4
      %s23 = int_to_ptr.vmem [resolvable:$true] %s22
      %28 = dma.hbm_to_vmem [thread:$0]  %s21, 512, %s23, [#allocation3], 128, 128, 8
    $region5: #{tpu_custom_call.1} parent=1 // pred_fallthru
      _
    // Predicated region
    $region6: #{tpu_custom_call.1} parent=1 // pred_check
      _
    $region7: #{tpu_custom_call.1} parent=1 // pred_check_branch
      %30 = sbr.rel (0) target = $region9
    $region8: #{tpu_custom_call.1} parent=1 // pred_region
      %s31 = sadd.s32 0, 0
      %p32 = scmp.lt.s32.totalorder %s31, 0
      %s33 = scalar_select %p32, %s31, 0
      %s34 = smul.u32 4, %s33
      %36 = vsyncadd [#allocation6], 0
      %s37 = smul.addr %s34, 8
      %s38 = scalar_lea.hbm %s1, %s37
      %s39 = sshll.u32 %s38, 4
      %s40 = int_to_ptr.hbm [resolvable:$true] %s39
      %s41 = sshll.u32 [#allocation5], 4
      %s42 = int_to_ptr.vmem [resolvable:$true] %s41
      %47 = dma.hbm_to_vmem [thread:$0]  %s40, 512, %s42, [#allocation6], 128, 128, 8
    $region9: #{tpu_custom_call.1} parent=1 // pred_fallthru
      _
    // Predicated region
    $region10: #{tpu_custom_call.1} parent=1 // pred_check
      _
    $region11: #{tpu_custom_call.1} parent=1 // pred_check_branch
      %49 = sbr.rel (0) target = $region13
    $region12: #{tpu_custom_call.1} parent=1 // pred_region
      %51 = dma.done [#allocation3], 512
    $region13: #{tpu_custom_call.1} parent=1 // pred_fallthru
      _
    // Predicated region
    $region14: #{tpu_custom_call.1} parent=1 // pred_check
      _
    $region15: #{tpu_custom_call.1} parent=1 // pred_check_branch
      %53 = sbr.rel (0) target = $region17
    $region16: #{tpu_custom_call.1} parent=1 // pred_region
      %55 = dma.done [#allocation6], 512
    $region17: #{tpu_custom_call.1} parent=1 // pred_fallthru
      _
    %s56 = sadd.s32 0, 0
    %p57 = scmp.lt.s32.totalorder %s56, 0
    %s58 = scalar_select %p57, %s56, 0
    %s59 = smul.u32 4, %s58
    %s60 = sadd.s32 0, 0
    %p61 = scmp.lt.s32.totalorder %s60, 0
    %s62 = scalar_select %p61, %s60, 0
    %s63 = smul.u32 4, %s62
    %p64 = scmp.eq.s32.totalorder 0, 0
    // Predicated region
    $region18: #{tpu_custom_call.1} parent=1 // pred_check
      %p65 = pneg %p64
    $region19: #{tpu_custom_call.1} parent=1 // pred_check_branch
      %67 = sbr.rel (%p65) target = $region21
    $region20: #{tpu_custom_call.1} parent=1 // pred_region
      %68 = vst [vmem:[#allocation7] sm:$0xff] 0.0
      %69 = vst [vmem:[#allocation7 + $0x8] sm:$0xff] 0.0
    $region21: #{tpu_custom_call.1} parent=1 // pred_fallthru
      _
    %v70 = vld [vmem:[#allocation2] sm:$0xff]
    %v71 = vld [vmem:[#allocation2 + $0x8] sm:$0xff]
    %v72 = vld [vmem:[#allocation2 + $0x10] sm:$0xff]
    %v73 = vld [vmem:[#allocation2 + $0x18] sm:$0xff]
    %v74 = vld [vmem:[#allocation5] sm:$0xff]
    %v75 = vld [vmem:[#allocation5 + $0x8] sm:$0xff]
    %v76 = vld [vmem:[#allocation5 + $0x10] sm:$0xff]
    %v77 = vld [vmem:[#allocation5 + $0x18] sm:$0xff]
    %v78 = vsub.f32 %v74, %v70
    %v79 = vsub.f32 %v75, %v71
    %v80 = vsub.f32 %v76, %v72
    %v81 = vsub.f32 %v77, %v73
    %v82 = vmul.f32 %v78, %v78
    %v83 = vmul.f32 %v79, %v79
    %v84 = vmul.f32 %v80, %v80
    %v85 = vmul.f32 %v81, %v81
    %v86 = vmul.f32 %v74, %v74
    %v87 = vmul.f32 %v75, %v75
    %v88 = vmul.f32 %v76, %v76
    %v89 = vmul.f32 %v77, %v77
    %v90 = vadd.f32 %v82, %v83
    %v91 = vadd.f32 %v90, %v84
    %v92 = vadd.f32 %v91, %v85
    %v93 = vadd.f32 %v86, %v87
    %v94 = vadd.f32 %v93, %v88
    %v95 = vadd.f32 %v94, %v89
    %v96 = vld [vmem:[#allocation7] sm:$0xff]
    %v97 = vadd.f32 %v96, %v92
    %98 = vst [vmem:[#allocation7] sm:$0xff] %v97
    %s99 = scalar_lea.vmem [#allocation7], 8
    %v100 = vld [vmem:[%s99] sm:$0xff]
    %v101 = vadd.f32 %v100, %v95
    %102 = vst [vmem:[%s99] sm:$0xff] %v101
    // Predicated region
    $region22: #{tpu_custom_call.1} parent=1 // pred_check
      _
    $region23: #{tpu_custom_call.1} parent=1 // pred_check_branch
      %104 = sbr.rel (0) target = $region25
    $region24: #{tpu_custom_call.1} parent=1 // pred_region
      %106 = vsyncadd [#allocation4], 0
      %s107 = sshll.u32 [#allocation7], 4
      %s108 = int_to_ptr.vmem [resolvable:$true] %s107
      %s109 = sshll.u32 %s2, 4
      %s110 = int_to_ptr.hbm [resolvable:$true] %s109
      %115 = dma.vmem_to_hbm [thread:$0]  %s108, 256, %s110, [#allocation4], 128, 128, 8
    $region25: #{tpu_custom_call.1} parent=1 // pred_fallthru
      _
    // Predicated region
    $region26: #{tpu_custom_call.1} parent=1 // pred_check
      _
    $region27: #{tpu_custom_call.1} parent=1 // pred_check_branch
      %117 = sbr.rel (0) target = $region29
    $region28: #{tpu_custom_call.1} parent=1 // pred_region
      %119 = dma.done [#allocation4], 256
    $region29: #{tpu_custom_call.1} parent=1 // pred_fallthru
      _
    %120 = vsyncpa [#allocation3], 1
    %121 = vsyncpa [#allocation6], 1
    %122 = vsyncpa [#allocation4], 1

</llo_original>
